<compile_context>
chip_gen: v7x
topology: tpu7x:2x2x1
jax: 0.10.0
libtpu: 0.0.40
codegen_flags: <defaults>
</compile_context>

<pallas_src>
import jax
import jax.numpy as jnp
from jax.experimental import pallas as pl
from jax.experimental.pallas import tpu as pltpu

_COS_EPS = 1e-8  # torch.nn.CosineSimilarity default


def _partial_loss_kernel(seg_ref, x_ref, y_ref, out_ref):
    # seg_ref: VMEM (TW, TH) f32 segment-sum matrix (resident; block index constant)
    # x_ref, y_ref: VMEM (1, 4, TW) input tiles (lane-dense, TW % 128 == 0)
    # out_ref: VMEM (1, 1, 3) f32 per-batch partial sums [dist, end, direction]
    h = pl.program_id(1)

    x = x_ref[0].astype(jnp.float32)  # (4, TW); upcast only matters for bf16 inputs
    y = y_ref[0].astype(jnp.float32)

    d = x[0:2, :] - y[0:2, :]          # MSE channels 0,1
    xd = x[2:4, :]                     # direction channels 2,3
    yd = y[2:4, :]

    # (8, TW): rows 0-1 squared diffs, 2-3 x.y, 4-5 x.x, 6-7 y.y
    prods = jnp.concatenate([d * d, xd * yd, xd * xd, yd * yd], axis=0)

    # Segment sums along W on the idle MXU: (8, TW) @ (TW, TH) -> (8, TH).
    sums = jnp.dot(
        prods,
        seg_ref[...],
        preferred_element_type=jnp.float32,
        precision=jax.lax.Precision.HIGHEST,
    )

    # MSE partial sums: sum of per-row segment sums == full sum over the tile.
    dist_sum = jnp.sum(sums[0:1, :])
    end_sum = jnp.sum(sums[1:2, :])

    # Cosine-similarity loss partial sum over the (2, TH) rows of this tile.
    dot = sums[2:4, :]
    sxx = sums[4:6, :]
    syy = sums[6:8, :]
    eps2 = jnp.float32(_COS_EPS * _COS_EPS)  # per-norm clamp, matches torch
    cos = dot * jax.lax.rsqrt(jnp.maximum(sxx, eps2)) \
              * jax.lax.rsqrt(jnp.maximum(syy, eps2))
    dir_sum = jnp.sum(1.0 - cos)

    idx = jax.lax.broadcasted_iota(jnp.int32, (1, 3), 1)
    partial = jnp.where(idx == 0, dist_sum,
                        jnp.where(idx == 1, end_sum, dir_sum))

    @pl.when(h == 0)
    def _():
        out_ref[0] = jnp.zeros((1, 3), jnp.float32)

    out_ref[0] = out_ref[0] + partial


def _choose_spatial_tile(hw, w, max_elems):
    """Largest TW dividing H*W that is a multiple of W and of 128, <= max_elems."""
    best = None
    t = w
    while t <= hw:
        if hw % t == 0 and t % 128 == 0 and t <= max_elems:
            best = t
        t += w
    if best is None:
        # Fall back to the whole spatial slab per grid step (always legal since
        # the block dim then equals the full array dim).
        best = hw
    return best


def multi_task_uncertainty_loss(x, y, log_var, *, max_tile_elems=64 * 1024):
    """x, y: [B, 4, H, W] float32/bfloat16 (NCHW); log_var: [3] float32."""
    B, C, H, W = x.shape
    assert C == 4, "expects 4 channels: [distance, end, direction_x, direction_y]"
    HW = H * W

    TW = _choose_spatial_tile(HW, W, max_tile_elems)  # lane-flattened tile width
    TH = TW // W                                      # rows (along H) per tile
    n_ht = HW // TW                                   # spatial tiles per batch

    # Free contiguous reshape: lane axis becomes H*W-tiles (multiple of 128).
    x_flat = x.reshape(B, C, HW)
    y_flat = y.reshape(B, C, HW)

    # Segment-sum matrix: S[k, s] = 1 iff element k of the flat tile belongs to row s.
    seg = (jnp.arange(TW, dtype=jnp.int32)[:, None] // W
           == jnp.arange(TH, dtype=jnp.int32)[None, :]).astype(jnp.float32)

    itemsize = jnp.dtype(x.dtype).itemsize
    cost = pl.CostEstimate(
        flops=int(6 * x.size + 2 * 8 * TW * TH * B * n_ht),
        transcendentals=int(4 * B * H),                     # 2 rsqrt per (b, 2, h)
        bytes_accessed=int(2 * x.size * itemsize + TW * TH * 4 + B * 3 * 4),
    )

    partials = pl.pallas_call(
        _partial_loss_kernel,
        out_shape=jax.ShapeDtypeStruct((B, 1, 3), jnp.float32),
        grid_spec=pltpu.PrefetchScalarGridSpec(
            num_scalar_prefetch=0,
            grid=(B, n_ht),
            in_specs=[
                pl.BlockSpec((TW, TH), lambda b, h: (0, 0)),      # segment matrix
                pl.BlockSpec((1, C, TW), lambda b, h: (b, 0, h)),  # x tile
                pl.BlockSpec((1, C, TW), lambda b, h: (b, 0, h)),  # y tile
            ],
            out_specs=pl.BlockSpec((1, 1, 3), lambda b, h: (b, 0, 0)),
        ),
        compiler_params=pltpu.CompilerParams(
            dimension_semantics=("parallel", "arbitrary")),
        cost_estimate=cost,
    )(seg, x_flat, y_flat)

    sums = jnp.sum(partials[:, 0, :], axis=0)           # (3,)
    distance_loss = sums[0] / jnp.float32(B * H * W)
    end_loss = sums[1] / jnp.float32(B * H * W)
    direction_loss = sums[2] / jnp.float32(B * 2 * H)

    lv = log_var.astype(jnp.float32)
    exp_fac = jnp.exp(-lv)
    regularization = jnp.logaddexp(0.0, lv)              # stable log(1 + exp(lv))
    total_loss = (exp_fac[0] * distance_loss + regularization[0]
                  + exp_fac[1] * end_loss + regularization[1]
                  + exp_fac[2] * direction_loss + regularization[2])

    return {
        "total_loss": total_loss,
        "distance_loss": distance_loss,
        "end_loss": end_loss,
        "direction_loss": direction_loss,
        "loss_variance": jnp.exp(lv),
    }


def _reference(x, y, log_var):
    """Pure-JAX faithful port of the PyTorch module (torch cosine eps semantics)."""
    x = x.astype(jnp.float32)
    y = y.astype(jnp.float32)
    distance = jnp.mean((x[:, :1] - y[:, :1]) ** 2)
    end = jnp.mean((x[:, 1:2] - y[:, 1:2]) ** 2)
    xd, yd = x[:, 2:4], y[:, 2:4]
    dot = jnp.sum(xd * yd, axis=-1)
    nx = jnp.maximum(jnp.sqrt(jnp.sum(xd * xd, axis=-1)), _COS_EPS)
    ny = jnp.maximum(jnp.sqrt(jnp.sum(yd * yd, axis=-1)), _COS_EPS)
    cos = dot / (nx * ny)
    direction = jnp.mean(1.0 - cos)
    exp_fac = jnp.exp(-log_var)
    reg = jnp.log1p(jnp.exp(log_var))
    total = (exp_fac[0] * distance + reg[0]
             + exp_fac[1] * end + reg[1]
             + exp_fac[2] * direction + reg[2])
    return total, distance, end, direction, jnp.exp(log_var)


if __name__ == "__main__":
    B, C, H, W = 2, 4, 16, 16
    key = jax.random.PRNGKey(0)
    kx, ky = jax.random.split(key)
    x = jax.random.normal(kx, (B, C, H, W), dtype=jnp.float32)
    y = jax.random.normal(ky, (B, C, H, W), dtype=jnp.float32)
    # Parameter init matches the module's __init__: torch.zeros(3)
    log_var = jnp.zeros((3,), dtype=jnp.float32)

    out = multi_task_uncertainty_loss(x, y, log_var)
    jax.block_until_ready(out)

    ref_total, ref_dist, ref_end, ref_dir, ref_var = _reference(x, y, log_var)
    checks = [
        (out["total_loss"], ref_total),
        (out["distance_loss"], ref_dist),
        (out["end_loss"], ref_end),
        (out["direction_loss"], ref_dir),
        (out["loss_variance"], ref_var),
    ]
    ok = all(bool(jnp.allclose(a, b, rtol=5e-4, atol=1e-5)) for a, b in checks)
    if not ok:
        raise AssertionError(
            "Pallas kernel does not match reference: "
            + str([(jnp.asarray(a), jnp.asarray(b)) for a, b in checks]))
    print("KERNEL_OK")
</pallas_src>

<mosaic_0001>
module attributes {stable_mosaic.version = 11 : i64} {
  func.func @_partial_loss_kernel(%arg0: i32, %arg1: i32, %arg2: memref<256x16xf32, #tpu.memory_space<vmem>>, %arg3: memref<1x4x256xf32, #tpu.memory_space<vmem>>, %arg4: memref<1x4x256xf32, #tpu.memory_space<vmem>>, %arg5: memref<1x1x3xf32, #tpu.memory_space<vmem>>) attributes {dimension_semantics = [#tpu.dimension_semantics<parallel>, #tpu.dimension_semantics<arbitrary>], iteration_bounds = array<i64: 2, 1>, scalar_prefetch = 0 : i64, scratch_operands = 0 : i64, tpu.core_type = #tpu.core_type<tc>, window_params = [{pipeline_mode = #tpu.pipeline_mode<synchronous>, transform_indices = @transform_0, window_bounds = array<i64: 256, 16>}, {transform_indices = @transform_1, window_bounds = array<i64: 1, 4, 256>}, {transform_indices = @transform_2, window_bounds = array<i64: 1, 4, 256>}, {transform_indices = @transform_3, window_bounds = array<i64: 1, 1, 3>}]} {
    %c0 = arith.constant 0 : index
    %c0_0 = arith.constant 0 : index
    %c0_1 = arith.constant 0 : index
    %0 = vector.load %arg3[%c0, %c0_0, %c0_1] : memref<1x4x256xf32, #tpu.memory_space<vmem>>, vector<1x4x256xf32>
    %1 = vector.shape_cast %0 : vector<1x4x256xf32> to vector<4x256xf32>
    %c0_2 = arith.constant 0 : index
    %c0_3 = arith.constant 0 : index
    %c0_4 = arith.constant 0 : index
    %2 = vector.load %arg4[%c0_2, %c0_3, %c0_4] : memref<1x4x256xf32, #tpu.memory_space<vmem>>, vector<1x4x256xf32>
    %3 = vector.shape_cast %2 : vector<1x4x256xf32> to vector<4x256xf32>
    %4 = vector.extract_strided_slice %1 {offsets = [0, 0], sizes = [2, 256], strides = [1, 1]} : vector<4x256xf32> to vector<2x256xf32>
    %5 = vector.extract_strided_slice %3 {offsets = [0, 0], sizes = [2, 256], strides = [1, 1]} : vector<4x256xf32> to vector<2x256xf32>
    %6 = arith.subf %4, %5 : vector<2x256xf32>
    %7 = vector.extract_strided_slice %1 {offsets = [2, 0], sizes = [2, 256], strides = [1, 1]} : vector<4x256xf32> to vector<2x256xf32>
    %8 = vector.extract_strided_slice %3 {offsets = [2, 0], sizes = [2, 256], strides = [1, 1]} : vector<4x256xf32> to vector<2x256xf32>
    %9 = arith.mulf %6, %6 : vector<2x256xf32>
    %10 = arith.mulf %7, %8 : vector<2x256xf32>
    %11 = arith.mulf %7, %7 : vector<2x256xf32>
    %12 = arith.mulf %8, %8 : vector<2x256xf32>
    %13 = tpu.concatenate %9, %10, %11, %12 in 0 : vector<2x256xf32>, vector<2x256xf32>, vector<2x256xf32>, vector<2x256xf32> -> vector<8x256xf32>
    %c0_5 = arith.constant 0 : index
    %c0_6 = arith.constant 0 : index
    %14 = vector.load %arg2[%c0_5, %c0_6] : memref<256x16xf32, #tpu.memory_space<vmem>>, vector<256x16xf32>
    %cst = arith.constant dense<0.000000e+00> : vector<8x16xf32>
    %15 = tpu.matmul %13, %14, %cst {dimension_numbers = #tpu.dot_dimension_numbers<[1], [0], [0], [1], [0, 0, 1, 1], [], []>, precision = #tpu.contract_precision<fp32>} : vector<8x256xf32>, vector<256x16xf32>, vector<8x16xf32> -> vector<8x16xf32>
    %16 = vector.extract_strided_slice %15 {offsets = [0, 0], sizes = [1, 16], strides = [1, 1]} : vector<8x16xf32> to vector<1x16xf32>
    %17 = vector.shape_cast %16 : vector<1x16xf32> to vector<1x1x16xf32>
    %cst_7 = arith.constant dense<0.000000e+00> : vector<1xf32>
    %18 = vector.multi_reduction <add>, %17, %cst_7 [1, 2] : vector<1x1x16xf32> to vector<1xf32>
    %19 = vector.shape_cast %18 : vector<1xf32> to vector<1x1x1xf32>
    %20 = vector.extract %19[0, 0, 0] : f32 from vector<1x1x1xf32>
    %21 = vector.extract_strided_slice %15 {offsets = [1, 0], sizes = [1, 16], strides = [1, 1]} : vector<8x16xf32> to vector<1x16xf32>
    %22 = vector.shape_cast %21 : vector<1x16xf32> to vector<1x1x16xf32>
    %cst_8 = arith.constant dense<0.000000e+00> : vector<1xf32>
    %23 = vector.multi_reduction <add>, %22, %cst_8 [1, 2] : vector<1x1x16xf32> to vector<1xf32>
    %24 = vector.shape_cast %23 : vector<1xf32> to vector<1x1x1xf32>
    %25 = vector.extract %24[0, 0, 0] : f32 from vector<1x1x1xf32>
    %26 = vector.extract_strided_slice %15 {offsets = [2, 0], sizes = [2, 16], strides = [1, 1]} : vector<8x16xf32> to vector<2x16xf32>
    %27 = vector.extract_strided_slice %15 {offsets = [4, 0], sizes = [2, 16], strides = [1, 1]} : vector<8x16xf32> to vector<2x16xf32>
    %28 = vector.extract_strided_slice %15 {offsets = [6, 0], sizes = [2, 16], strides = [1, 1]} : vector<8x16xf32> to vector<2x16xf32>
    %cst_9 = arith.constant 1.000000e-16 : f32
    %29 = vector.broadcast %cst_9 : f32 to vector<2x16xf32>
    %30 = arith.maximumf %27, %29 : vector<2x16xf32>
    %31 = math.rsqrt %30 : vector<2x16xf32>
    %32 = arith.mulf %26, %31 : vector<2x16xf32>
    %cst_10 = arith.constant 1.000000e-16 : f32
    %33 = vector.broadcast %cst_10 : f32 to vector<2x16xf32>
    %34 = arith.maximumf %28, %33 : vector<2x16xf32>
    %35 = math.rsqrt %34 : vector<2x16xf32>
    %36 = arith.mulf %32, %35 : vector<2x16xf32>
    %cst_11 = arith.constant 1.000000e+00 : f32
    %37 = vector.broadcast %cst_11 : f32 to vector<2x16xf32>
    %38 = arith.subf %37, %36 : vector<2x16xf32>
    %39 = vector.shape_cast %38 : vector<2x16xf32> to vector<1x2x16xf32>
    %cst_12 = arith.constant dense<0.000000e+00> : vector<1xf32>
    %40 = vector.multi_reduction <add>, %39, %cst_12 [1, 2] : vector<1x2x16xf32> to vector<1xf32>
    %41 = vector.shape_cast %40 : vector<1xf32> to vector<1x1x1xf32>
    %42 = vector.extract %41[0, 0, 0] : f32 from vector<1x1x1xf32>
    %43 = tpu.iota {dimensions = array<i32: 1>} : vector<1x3xi32>
    %c0_i32 = arith.constant 0 : i32
    %44 = vector.broadcast %c0_i32 : i32 to vector<1x3xi32>
    %45 = arith.cmpi eq, %43, %44 : vector<1x3xi32>
    %c1_i32 = arith.constant 1 : i32
    %46 = vector.broadcast %c1_i32 : i32 to vector<1x3xi32>
    %47 = arith.cmpi eq, %43, %46 : vector<1x3xi32>
    %48 = vector.broadcast %25 : f32 to vector<1x3xf32>
    %49 = vector.broadcast %42 : f32 to vector<1x3xf32>
    %50 = arith.select %47, %48, %49 : vector<1x3xi1>, vector<1x3xf32>
    %51 = vector.broadcast %20 : f32 to vector<1x3xf32>
    %52 = arith.select %45, %51, %50 : vector<1x3xi1>, vector<1x3xf32>
    %c0_i32_13 = arith.constant 0 : i32
    %53 = arith.cmpi eq, %arg1, %c0_i32_13 : i32
    %54 = arith.extui %53 : i1 to i32
    %c0_i32_14 = arith.constant 0 : i32
    %55 = arith.cmpi ne, %54, %c0_i32_14 : i32
    scf.if %55 {
      %cst_21 = arith.constant 0.000000e+00 : f32
      %62 = vector.broadcast %cst_21 : f32 to vector<1x3xf32>
      %c0_22 = arith.constant 0 : index
      %c0_23 = arith.constant 0 : index
      %c0_24 = arith.constant 0 : index
      %63 = vector.load %arg5[%c0_22, %c0_23, %c0_24] : memref<1x1x3xf32, #tpu.memory_space<vmem>>, vector<1x1x3xf32>
      %64 = vector.shape_cast %63 : vector<1x1x3xf32> to vector<1x3xf32>
      %65 = vector.shape_cast %62 : vector<1x3xf32> to vector<1x1x3xf32>
      tpu.vector_store %arg5[%c0_22, %c0_23, %c0_24], %65 {strides = array<i32>} : memref<1x1x3xf32, #tpu.memory_space<vmem>>, vector<1x1x3xf32>,
    } else {
    }
    %c0_15 = arith.constant 0 : index
    %c0_16 = arith.constant 0 : index
    %c0_17 = arith.constant 0 : index
    %56 = vector.load %arg5[%c0_15, %c0_16, %c0_17] : memref<1x1x3xf32, #tpu.memory_space<vmem>>, vector<1x1x3xf32>
    %57 = vector.shape_cast %56 : vector<1x1x3xf32> to vector<1x3xf32>
    %58 = arith.addf %57, %52 : vector<1x3xf32>
    %c0_18 = arith.constant 0 : index
    %c0_19 = arith.constant 0 : index
    %c0_20 = arith.constant 0 : index
    %59 = vector.load %arg5[%c0_18, %c0_19, %c0_20] : memref<1x1x3xf32, #tpu.memory_space<vmem>>, vector<1x1x3xf32>
    %60 = vector.shape_cast %59 : vector<1x1x3xf32> to vector<1x3xf32>
    %61 = vector.shape_cast %58 : vector<1x3xf32> to vector<1x1x3xf32>
    tpu.vector_store %arg5[%c0_18, %c0_19, %c0_20], %61 {strides = array<i32>} : memref<1x1x3xf32, #tpu.memory_space<vmem>>, vector<1x1x3xf32>,
    return
  }
  func.func @transform_0(%arg0: i32, %arg1: i32) -> (i32, i32) {
    %c0_i32 = arith.constant 0 : i32
    %c0_i32_0 = arith.constant 0 : i32
    %c0_i32_1 = arith.constant 0 : i32
    return %c0_i32, %c0_i32_0 : i32, i32
  }
  func.func @transform_1(%arg0: i32, %arg1: i32) -> (i32, i32, i32) {
    %c0_i32 = arith.constant 0 : i32
    %c0_i32_0 = arith.constant 0 : i32
    return %arg0, %c0_i32, %arg1 : i32, i32, i32
  }
  func.func @transform_2(%arg0: i32, %arg1: i32) -> (i32, i32, i32) {
    %c0_i32 = arith.constant 0 : i32
    %c0_i32_0 = arith.constant 0 : i32
    return %arg0, %c0_i32, %arg1 : i32, i32, i32
  }
  func.func @transform_3(%arg0: i32, %arg1: i32) -> (i32, i32, i32) {
    %c0_i32 = arith.constant 0 : i32
    %c0_i32_0 = arith.constant 0 : i32
    %c0_i32_1 = arith.constant 0 : i32
    return %arg0, %c0_i32, %c0_i32_0 : i32, i32, i32
  }
}

</mosaic_0001>

<llo_original>
// kernel: tpu_custom_call.1
$region0: #{tpu_custom_call.1}
  #allocation0 [shape = 'u32[]', space=smem, size = 0x4, offset = 0x4, fixed_abs, tag = 'smem constant byte address 0x4 - core index']
  #allocation1 [shape = 'u32[144,128]{1,0:T(1,128)}', space=vmem, size = 0x12000, scoped, tag = 'internal scratch']
  %s0 = inlined_call_operand.vmem [shape: f32[256,16], index: 0, kind: input, shape index: {}]
  %s1 = inlined_call_operand.vmem [shape: f32[2,4,256], index: 1, kind: input, shape index: {}]
  %s2 = inlined_call_operand.vmem [shape: f32[2,4,256], index: 2, kind: input, shape index: {}]
  %s3 = inlined_call_operand.hbm [shape: f32[2,1,3], index: 3, kind: output, shape index: {}]
  %s4 = sld [smem:[#allocation0]]
  $region49: #{tpu_custom_call.1} parent=0
    _
  %s6 = ssub.s32 1, %s4
  %s7 = scalar_select 0, %s6, %s4
  $region1: #{tpu_custom_call.1} parent=0
    #allocation2 [shape = 'u8[1024]{0}', space=vmem, size = 0x400, scoped, tag = 'output window, operand 0']
    #allocation3 [shape = 's32[2]{0}', space=sflag, size = 0x8, scoped, tag = 'scoped memory for tpu_custom_call.1']
    %8 = vsyncpa [#allocation3], 0
    %s9 = scalar_lea.sflag [#allocation3], 1
    %10 = vsyncpa %s9, 0
    loop: start=0, step=1, limit=4
    $region2: #{tpu_custom_call.1} parent=1 // loop_pre_header
      _
    $region3: #{tpu_custom_call.1} parent=1 // loop_header
      %s12 = sphi 0, %s16
      %p13 = scmp.ge.s32.totalorder %s12, 4
      %s19 = sphi 0, %s31
      %s20 = sphi 0, %s27
      %s21 = sphi 0, %s19
      %s22 = sphi 0, %s20
      %s23 = sphi 0, %s21
      %s24 = sphi 0, %s22
      %s32 = sphi 0, %s32
      %s34 = sphi 0, %s32
      %s35 = sphi 0, %s34
      %s49 = sphi 0, %s35
      %s57 = sphi 0, %s59
      %s60 = sphi 0, %s57
      %s61 = sphi 0, %s60
      %s77 = sphi 0, %s61
      %s85 = sphi 0, %s87
      %s88 = sphi 0, %s85
      %s89 = sphi 0, %s88
      %s105 = sphi 0, %s89
      %s111 = sphi 0, %s113
      %s114 = sphi 0, %s111
      %s115 = sphi 0, %s114
      %s131 = sphi 0, %s115
    $region4: #{tpu_custom_call.1} parent=1 // loop_header_branch
      %15 = sbr.rel (%p13) target = $region8
    $region5: #{tpu_custom_call.1} parent=1 // loop_body
      %s17 = ssub.s32 %s12, 1
      %s18 = ssub.s32 %s12, 2
      %s25 = sadd.s32 1, %s20
      %p26 = scmp.ge.s32.totalorder %s25, 1
      %s27 = scalar_select %p26, 0, %s25
      %s28 = sadd.s32 1, %s19
      %s29 = scalar_select %p26, %s28, %s19
      %p30 = scmp.ge.s32.totalorder %s29, 2
      %s31 = scalar_select %p30, 0, %s29
      %s33 = sadd.s32 %s32, 1
      %p36 = scmp.eq.s32.totalorder %s12, 1
      %p37 = scmp.ne.s32.totalorder %s32, %s34
      %p38 = scmp.eq.s32.totalorder %s12, 0
      %p39 = por %p37, %p38
      %p40 = scmp.ne.s32.totalorder %s32, %s34
      %p41 = scmp.eq.s32.totalorder %s17, 1
      %p42 = por %p40, %p41
      %p43 = scmp.ne.s32.totalorder %s34, %s35
      %p44 = scmp.eq.s32.totalorder %s17, 0
      %p45 = por %p43, %p44
      %p46 = scmp.ne.s32.totalorder %s34, %s35
      %p47 = scmp.eq.s32.totalorder %s18, 1
      %p48 = por %p46, %p47
      %p50 = scmp.ne.s32.totalorder %s35, %s49
      %p51 = scmp.eq.s32.totalorder %s18, 0
      %p52 = por %p50, %p51
      %s53 = ssub.s32 %s19, %s31
      %s54 = ssub.s32 %s20, %s27
      %s55 = sor.u32 %s53, %s54
      %p56 = scmp.eq.s32.totalorder %s55, 0
      %s58 = sadd.s32 %s57, 1
      %s59 = scalar_select %p56, %s57, %s58
      %p62 = pneg %p56
      %p63 = scmp.eq.s32.totalorder %s12, 1
      %p64 = por %p62, %p63
      %p65 = scmp.ne.s32.totalorder %s57, %s60
      %p66 = scmp.eq.s32.totalorder %s12, 0
      %p67 = por %p65, %p66
      %p68 = scmp.ne.s32.totalorder %s57, %s60
      %p69 = scmp.eq.s32.totalorder %s17, 1
      %p70 = por %p68, %p69
      %p71 = scmp.ne.s32.totalorder %s60, %s61
      %p72 = scmp.eq.s32.totalorder %s17, 0
      %p73 = por %p71, %p72
      %p74 = scmp.ne.s32.totalorder %s60, %s61
      %p75 = scmp.eq.s32.totalorder %s18, 1
      %p76 = por %p74, %p75
      %p78 = scmp.ne.s32.totalorder %s61, %s77
      %p79 = scmp.eq.s32.totalorder %s18, 0
      %p80 = por %p78, %p79
      %s81 = ssub.s32 %s19, %s31
      %s82 = ssub.s32 %s20, %s27
      %s83 = sor.u32 %s81, %s82
      %p84 = scmp.eq.s32.totalorder %s83, 0
      %s86 = sadd.s32 %s85, 1
      %s87 = scalar_select %p84, %s85, %s86
      %p90 = pneg %p84
      %p91 = scmp.eq.s32.totalorder %s12, 1
      %p92 = por %p90, %p91
      %p93 = scmp.ne.s32.totalorder %s85, %s88
      %p94 = scmp.eq.s32.totalorder %s12, 0
      %p95 = por %p93, %p94
      %p96 = scmp.ne.s32.totalorder %s85, %s88
      %p97 = scmp.eq.s32.totalorder %s17, 1
      %p98 = por %p96, %p97
      %p99 = scmp.ne.s32.totalorder %s88, %s89
      %p100 = scmp.eq.s32.totalorder %s17, 0
      %p101 = por %p99, %p100
      %p102 = scmp.ne.s32.totalorder %s88, %s89
      %p103 = scmp.eq.s32.totalorder %s18, 1
      %p104 = por %p102, %p103
      %p106 = scmp.ne.s32.totalorder %s89, %s105
      %p107 = scmp.eq.s32.totalorder %s18, 0
      %p108 = por %p106, %p107
      %s109 = ssub.s32 %s19, %s31
      %p110 = scmp.eq.s32.totalorder %s109, 0
      %s112 = sadd.s32 %s111, 1
      %s113 = scalar_select %p110, %s111, %s112
      %p116 = pneg %p110
      %p117 = scmp.eq.s32.totalorder %s12, 1
      %p118 = por %p116, %p117
      %p119 = scmp.ne.s32.totalorder %s111, %s114
      %p120 = scmp.eq.s32.totalorder %s12, 0
      %p121 = por %p119, %p120
      %p122 = scmp.ne.s32.totalorder %s111, %s114
      %p123 = scmp.eq.s32.totalorder %s17, 1
      %p124 = por %p122, %p123
      %p125 = scmp.ne.s32.totalorder %s114, %s115
      %p126 = scmp.eq.s32.totalorder %s17, 0
      %p127 = por %p125, %p126
      %p128 = scmp.ne.s32.totalorder %s114, %s115
      %p129 = scmp.eq.s32.totalorder %s18, 1
      %p130 = por %p128, %p129
      %p132 = scmp.ne.s32.totalorder %s115, %s131
      %p133 = scmp.eq.s32.totalorder %s18, 0
      %p134 = por %p132, %p133
      %p135 = scmp.le.s32.totalorder 1, %s12
      %p136 = scmp.lt.s32.totalorder %s12, 3
      %p137 = pnand %p135, %p136
      %p138 = pneg %p137
      // Predicated region
      $region9: #{tpu_custom_call.1} parent=5 // pred_check
        _
      $region10: #{tpu_custom_call.1} parent=5 // pred_check_branch
        %140 = sbr.rel (%p137) target = $region12
      $region11: #{tpu_custom_call.1} parent=5 // pred_region
        %s141 = ssub.s32 %s12, 1
        // Predicated region
        $region13: #{tpu_custom_call.1} parent=11 // pred_check
          %p142 = pneg %p45
        $region14: #{tpu_custom_call.1} parent=11 // pred_check_branch
          %144 = sbr.rel (%p142) target = $region16
        $region15: #{tpu_custom_call.1} parent=11 // pred_region
          _
        $region16: #{tpu_custom_call.1} parent=11 // pred_fallthru
          _
      $region12: #{tpu_custom_call.1} parent=5 // pred_fallthru
        _
      %p145 = scmp.lt.s32.totalorder %s12, 2
      // Predicated region
      $region17: #{tpu_custom_call.1} parent=5 // pred_check
        %p146 = pneg %p145
      $region18: #{tpu_custom_call.1} parent=5 // pred_check_branch
        %148 = sbr.rel (%p146) target = $region20
      $region19: #{tpu_custom_call.1} parent=5 // pred_region
        // Predicated region
        $region21: #{tpu_custom_call.1} parent=19 // pred_check
          %p149 = pneg %p67
        $region22: #{tpu_custom_call.1} parent=19 // pred_check_branch
          %151 = sbr.rel (%p149) target = $region24
        $region23: #{tpu_custom_call.1} parent=19 // pred_region
          %s152 = smul.u32 2, %s20
          %p153 = scmp.lt.s32.totalorder %s19, 1
          %s154 = scalar_select %p153, %s19, 1
          %p155 = scmp.lt.s32.totalorder %s152, 1
          %s156 = scalar_select %p155, %s152, 1
          %s157 = smul.addr %s154, 2
          %s158 = sadd.s32 %s156, %s157
          %s159 = smul.addr %s158, 4
          %s160 = scalar_lea.vmem %s1, %s159
          %s161 = smul.u32 2, %s20
        $region24: #{tpu_custom_call.1} parent=19 // pred_fallthru
          _
        // Predicated region
        $region25: #{tpu_custom_call.1} parent=19 // pred_check
          %p162 = pneg %p95
        $region26: #{tpu_custom_call.1} parent=19 // pred_check_branch
          %164 = sbr.rel (%p162) target = $region28
        $region27: #{tpu_custom_call.1} parent=19 // pred_region
          %s165 = smul.u32 2, %s20
          %p166 = scmp.lt.s32.totalorder %s19, 1
          %s167 = scalar_select %p166, %s19, 1
          %p168 = scmp.lt.s32.totalorder %s165, 1
          %s169 = scalar_select %p168, %s165, 1
          %s170 = smul.addr %s167, 2
          %s171 = sadd.s32 %s169, %s170
          %s172 = smul.addr %s171, 4
          %s173 = scalar_lea.vmem %s2, %s172
          %s174 = smul.u32 2, %s20
        $region28: #{tpu_custom_call.1} parent=19 // pred_fallthru
          _
      $region20: #{tpu_custom_call.1} parent=5 // pred_fallthru
        _
      %p175 = scmp.le.s32.totalorder 1, %s12
      %p176 = scmp.lt.s32.totalorder %s12, 3
      %p177 = pnand %p175, %p176
      %p178 = pneg %p177
      // Predicated region
      $region29: #{tpu_custom_call.1} parent=5 // pred_check
        _
      $region30: #{tpu_custom_call.1} parent=5 // pred_check_branch
        %180 = sbr.rel (%p177) target = $region32
      $region31: #{tpu_custom_call.1} parent=5 // pred_region
        %s181 = ssub.s32 %s12, 1
        %p182 = pneg %p45
        %p183 = pneg %p42
        %s184 = smul.u32 2, %s22
        %p185 = scmp.lt.s32.totalorder %s21, 1
        %s186 = scalar_select %p185, %s21, 1
        %p187 = scmp.lt.s32.totalorder %s184, 1
        %s188 = scalar_select %p187, %s184, 1
        %s189 = smul.addr %s186, 2
        %s190 = sadd.s32 %s188, %s189
        %s191 = smul.addr %s190, 4
        %s192 = scalar_lea.vmem %s1, %s191
        %p193 = pneg %p73
        %p194 = pneg %p70
        %s195 = smul.u32 2, %s22
        %p196 = scmp.lt.s32.totalorder %s21, 1
        %s197 = scalar_select %p196, %s21, 1
        %p198 = scmp.lt.s32.totalorder %s195, 1
        %s199 = scalar_select %p198, %s195, 1
        %s200 = smul.addr %s197, 2
        %s201 = sadd.s32 %s199, %s200
        %s202 = smul.addr %s201, 4
        %s203 = scalar_lea.vmem %s2, %s202
        %p204 = pneg %p101
        %p205 = pneg %p98
        %p206 = pneg %p127
        %p207 = pneg %p124
        %s208 = sand.u32 %s114, 1
        %s209 = scalar_lea.sflag [#allocation3], %s208
        %s210 = sand.u32 %s114, 1
        %s211 = scalar_lea.vmem [#allocation2], %s210
        %s212 = smul.u32 2, %s22
        %p213 = scmp.lt.s32.totalorder %s21, 1
        %s214 = scalar_select %p213, %s21, 1
        %p215 = scmp.lt.s32.totalorder %s212, 1
        %s216 = scalar_select %p215, %s212, 1
        %s217 = smul.addr %s214, 2
        %s218 = sadd.s32 %s216, %s217
        %s219 = smul.addr %s218, 4
        %s220 = scalar_lea.vmem %s1, %s219
        %s221 = smul.u32 2, %s22
        %s222 = smul.u32 2, %s22
        %p223 = scmp.lt.s32.totalorder %s21, 1
        %s224 = scalar_select %p223, %s21, 1
        %p225 = scmp.lt.s32.totalorder %s222, 1
        %s226 = scalar_select %p225, %s222, 1
        %s227 = smul.addr %s224, 2
        %s228 = sadd.s32 %s226, %s227
        %s229 = smul.addr %s228, 4
        %s230 = scalar_lea.vmem %s2, %s229
        %s231 = smul.u32 2, %s22
        %v232 = vld [vmem:[%s220] sm:$0xff]
        %v233 = vld [vmem:[%s230] sm:$0xff]
        %v234 = vsub.f32 %v232, %v233
        %v235 = vmul.f32 %v234, %v234
        %v236 = vmul.f32 %v232, %v233
        %v237 = vmul.f32 %v232, %v232
        %v238 = vmul.f32 %v233, %v233
        %v240 = vcombine.high %v235, %v235
        %v243 = vcombine.high %v236, %v236
        %v246 = vcombine.high %v237, %v237
        %v247 = vrot.slane %v237, 6
        %v248 = vrot.slane %v246, 6
        %v252 = vcombine.low %v238, %v238
        %vm254 = vcmask 1041408
        %v255 = vsel %vm254, %v235, %v236
        %v256 = vsel %vm254, %v240, %v243
        %vm257 = vcmask 1043456
        %v258 = vsel %vm257, %v255, %v247
        %v259 = vsel %vm257, %v256, %v248
        %vm260 = vcmask 1045504
        %v261 = vsel %vm260, %v258, %v252
        %v262 = vsel %vm260, %v259, %v238
        %v263 = vld [vmem:[%s0] sm:$0xff]
        %v264 = vld [vmem:[%s0 + $0x8] sm:$0xff]
        %v265 = vld [vmem:[%s0 + $0x10] sm:$0xff]
        %v266 = vld [vmem:[%s0 + $0x18] sm:$0xff]
        %v267 = vld [vmem:[%s0 + $0x20] sm:$0xff]
        %v268 = vld [vmem:[%s0 + $0x28] sm:$0xff]
        %v269 = vld [vmem:[%s0 + $0x30] sm:$0xff]
        %v270 = vld [vmem:[%s0 + $0x38] sm:$0xff]
        %v271 = vld [vmem:[%s0 + $0x40] sm:$0xff]
        %v272 = vld [vmem:[%s0 + $0x48] sm:$0xff]
        %v273 = vld [vmem:[%s0 + $0x50] sm:$0xff]
        %v274 = vld [vmem:[%s0 + $0x58] sm:$0xff]
        %v275 = vld [vmem:[%s0 + $0x60] sm:$0xff]
        %v276 = vld [vmem:[%s0 + $0x68] sm:$0xff]
        %v277 = vld [vmem:[%s0 + $0x70] sm:$0xff]
        %v278 = vld [vmem:[%s0 + $0x78] sm:$0xff]
        %v279 = vld [vmem:[%s0 + $0x80] sm:$0xff]
        %v280 = vld [vmem:[%s0 + $0x88] sm:$0xff]
        %v281 = vld [vmem:[%s0 + $0x90] sm:$0xff]
        %v282 = vld [vmem:[%s0 + $0x98] sm:$0xff]
        %v283 = vld [vmem:[%s0 + $0xa0] sm:$0xff]
        %v284 = vld [vmem:[%s0 + $0xa8] sm:$0xff]
        %v285 = vld [vmem:[%s0 + $0xb0] sm:$0xff]
        %v286 = vld [vmem:[%s0 + $0xb8] sm:$0xff]
        %v287 = vld [vmem:[%s0 + $0xc0] sm:$0xff]
        %v288 = vld [vmem:[%s0 + $0xc8] sm:$0xff]
        %v289 = vld [vmem:[%s0 + $0xd0] sm:$0xff]
        %v290 = vld [vmem:[%s0 + $0xd8] sm:$0xff]
        %v291 = vld [vmem:[%s0 + $0xe0] sm:$0xff]
        %v292 = vld [vmem:[%s0 + $0xe8] sm:$0xff]
        %v293 = vld [vmem:[%s0 + $0xf0] sm:$0xff]
        %v294 = vld [vmem:[%s0 + $0xf8] sm:$0xff]
        %295 = vmatprep.subr.mxu0 0.0
        %v296 = vand.u32 %v263, 4294901760
        %297 = vmatpush1.msra.mxu0 %v296
        %298 = vmatprep.subr.mxu0 0.0
        %v299 = vand.u32 %v264, 4294901760
        %300 = vmatpush1.msra.mxu0 %v299
        %301 = vmatprep.subr.mxu0 0.0
        %v302 = vand.u32 %v265, 4294901760
        %303 = vmatpush1.msra.mxu0 %v302
        %304 = vmatprep.subr.mxu0 0.0
        %v305 = vand.u32 %v266, 4294901760
        %306 = vmatpush1.msra.mxu0 %v305
        %307 = vmatprep.subr.mxu0 0.0
        %v308 = vand.u32 %v267, 4294901760
        %309 = vmatpush1.msra.mxu0 %v308
        %310 = vmatprep.subr.mxu0 0.0
        %v311 = vand.u32 %v268, 4294901760
        %312 = vmatpush1.msra.mxu0 %v311
        %313 = vmatprep.subr.mxu0 0.0
        %v314 = vand.u32 %v269, 4294901760
        %315 = vmatpush1.msra.mxu0 %v314
        %316 = vmatprep.subr.mxu0 0.0
        %v317 = vand.u32 %v270, 4294901760
        %318 = vmatpush1.msra.mxu0 %v317
        %319 = vmatprep.subr.mxu0 0.0
        %v320 = vand.u32 %v271, 4294901760
        %321 = vmatpush1.msra.mxu0 %v320
        %322 = vmatprep.subr.mxu0 0.0
        %v323 = vand.u32 %v272, 4294901760
        %324 = vmatpush1.msra.mxu0 %v323
        %325 = vmatprep.subr.mxu0 0.0
        %v326 = vand.u32 %v273, 4294901760
        %327 = vmatpush1.msra.mxu0 %v326
        %328 = vmatprep.subr.mxu0 0.0
        %v329 = vand.u32 %v274, 4294901760
        %330 = vmatpush1.msra.mxu0 %v329
        %331 = vmatprep.subr.mxu0 0.0
        %v332 = vand.u32 %v275, 4294901760
        %333 = vmatpush1.msra.mxu0 %v332
        %334 = vmatprep.subr.mxu0 0.0
        %v335 = vand.u32 %v276, 4294901760
        %336 = vmatpush1.msra.mxu0 %v335
        %337 = vmatprep.subr.mxu0 0.0
        %v338 = vand.u32 %v277, 4294901760
        %339 = vmatpush1.msra.mxu0 %v338
        %340 = vmatprep.subr.mxu0 0.0
        %v341 = vand.u32 %v278, 4294901760
        %342 = vmatpush1.msra.mxu0 %v341
        %343 = vmatprep.subr.mxu0 0.0
        %v344 = vand.u32 %v279, 4294901760
        %345 = vmatpush1.msra.mxu0 %v344
        %346 = vmatprep.subr.mxu0 0.0
        %v347 = vand.u32 %v280, 4294901760
        %348 = vmatpush1.msra.mxu0 %v347
        %349 = vmatprep.subr.mxu0 0.0
        %v350 = vand.u32 %v281, 4294901760
        %351 = vmatpush1.msra.mxu0 %v350
        %352 = vmatprep.subr.mxu0 0.0
        %v353 = vand.u32 %v282, 4294901760
        %354 = vmatpush1.msra.mxu0 %v353
        %355 = vmatprep.subr.mxu0 0.0
        %v356 = vand.u32 %v283, 4294901760
        %357 = vmatpush1.msra.mxu0 %v356
        %358 = vmatprep.subr.mxu0 0.0
        %v359 = vand.u32 %v284, 4294901760
        %360 = vmatpush1.msra.mxu0 %v359
        %361 = vmatprep.subr.mxu0 0.0
        %v362 = vand.u32 %v285, 4294901760
        %363 = vmatpush1.msra.mxu0 %v362
        %364 = vmatprep.subr.mxu0 0.0
        %v365 = vand.u32 %v286, 4294901760
        %366 = vmatpush1.msra.mxu0 %v365
        %367 = vmatprep.subr.mxu0 0.0
        %v368 = vand.u32 %v287, 4294901760
        %369 = vmatpush1.msra.mxu0 %v368
        %370 = vmatprep.subr.mxu0 0.0
        %v371 = vand.u32 %v288, 4294901760
        %372 = vmatpush1.msra.mxu0 %v371
        %373 = vmatprep.subr.mxu0 0.0
        %v374 = vand.u32 %v289, 4294901760
        %375 = vmatpush1.msra.mxu0 %v374
        %376 = vmatprep.subr.mxu0 0.0
        %v377 = vand.u32 %v290, 4294901760
        %378 = vmatpush1.msra.mxu0 %v377
        %379 = vmatprep.subr.mxu0 0.0
        %v380 = vand.u32 %v291, 4294901760
        %381 = vmatpush1.msra.mxu0 %v380
        %382 = vmatprep.subr.mxu0 0.0
        %v383 = vand.u32 %v292, 4294901760
        %384 = vmatpush1.msra.mxu0 %v383
        %385 = vmatprep.subr.mxu0 0.0
        %v386 = vand.u32 %v293, 4294901760
        %387 = vmatpush1.msra.mxu0 %v386
        %388 = vmatprep.subr.mxu0 0.0
        %v389 = vand.u32 %v294, 4294901760
        %390 = vmatpush1.msra.mxu0 %v389
        %v391 = vand.u32 %v262, 4294901760
        %v392 = vsub.f32 %v262, %v391
        %v393 = vand.u32 %v392, 4294901760
        %v394 = vsub.f32 %v392, %v393
        %v395 = vand.u32 %v394, 4294901760
        %396 = vmatprep.mubr.f32.mxu0 %v395
        %v397 = vand.u32 %v261, 4294901760
        %v398 = vsub.f32 %v261, %v397
        %v399 = vand.u32 %v398, 4294901760
        %v400 = vsub.f32 %v398, %v399
        %v401 = vand.u32 %v400, 4294901760
        %402 = vmatmul.mubr.f32.gmra.mrb[0].mxu0 %v401
        %v403 = vpop.f32.mrb[0].mxu0
        %v404 = vadd.f32 0.0, %v403
        %v405 = vpop.f32.mrb[0].mxu0
        %406 = vdwg.mxu0
        %407 = vmatprep.subr.mxu0 0.0
        %v408 = vand.u32 %v263, 4294901760
        %v409 = vsub.f32 %v263, %v408
        %v410 = vand.u32 %v409, 4294901760
        %v411 = vsub.f32 %v409, %v410
        %v412 = vand.u32 %v411, 4294901760
        %413 = vmatpush1.msra.mxu0 %v412
        %414 = vmatprep.subr.mxu0 0.0
        %v415 = vand.u32 %v264, 4294901760
        %v416 = vsub.f32 %v264, %v415
        %v417 = vand.u32 %v416, 4294901760
        %v418 = vsub.f32 %v416, %v417
        %v419 = vand.u32 %v418, 4294901760
        %420 = vmatpush1.msra.mxu0 %v419
        %421 = vmatprep.subr.mxu0 0.0
        %v422 = vand.u32 %v265, 4294901760
        %v423 = vsub.f32 %v265, %v422
        %v424 = vand.u32 %v423, 4294901760
        %v425 = vsub.f32 %v423, %v424
        %v426 = vand.u32 %v425, 4294901760
        %427 = vmatpush1.msra.mxu0 %v426
        %428 = vmatprep.subr.mxu0 0.0
        %v429 = vand.u32 %v266, 4294901760
        %v430 = vsub.f32 %v266, %v429
        %v431 = vand.u32 %v430, 4294901760
        %v432 = vsub.f32 %v430, %v431
        %v433 = vand.u32 %v432, 4294901760
        %434 = vmatpush1.msra.mxu0 %v433
        %435 = vmatprep.subr.mxu0 0.0
        %v436 = vand.u32 %v267, 4294901760
        %v437 = vsub.f32 %v267, %v436
        %v438 = vand.u32 %v437, 4294901760
        %v439 = vsub.f32 %v437, %v438
        %v440 = vand.u32 %v439, 4294901760
        %441 = vmatpush1.msra.mxu0 %v440
        %442 = vmatprep.subr.mxu0 0.0
        %v443 = vand.u32 %v268, 4294901760
        %v444 = vsub.f32 %v268, %v443
        %v445 = vand.u32 %v444, 4294901760
        %v446 = vsub.f32 %v444, %v445
        %v447 = vand.u32 %v446, 4294901760
        %448 = vmatpush1.msra.mxu0 %v447
        %449 = vmatprep.subr.mxu0 0.0
        %v450 = vand.u32 %v269, 4294901760
        %v451 = vsub.f32 %v269, %v450
        %v452 = vand.u32 %v451, 4294901760
        %v453 = vsub.f32 %v451, %v452
        %v454 = vand.u32 %v453, 4294901760
        %455 = vmatpush1.msra.mxu0 %v454
        %456 = vmatprep.subr.mxu0 0.0
        %v457 = vand.u32 %v270, 4294901760
        %v458 = vsub.f32 %v270, %v457
        %v459 = vand.u32 %v458, 4294901760
        %v460 = vsub.f32 %v458, %v459
        %v461 = vand.u32 %v460, 4294901760
        %462 = vmatpush1.msra.mxu0 %v461
        %463 = vmatprep.subr.mxu0 0.0
        %v464 = vand.u32 %v271, 4294901760
        %v465 = vsub.f32 %v271, %v464
        %v466 = vand.u32 %v465, 4294901760
        %v467 = vsub.f32 %v465, %v466
        %v468 = vand.u32 %v467, 4294901760
        %469 = vmatpush1.msra.mxu0 %v468
        %470 = vmatprep.subr.mxu0 0.0
        %v471 = vand.u32 %v272, 4294901760
        %v472 = vsub.f32 %v272, %v471
        %v473 = vand.u32 %v472, 4294901760
        %v474 = vsub.f32 %v472, %v473
        %v475 = vand.u32 %v474, 4294901760
        %476 = vmatpush1.msra.mxu0 %v475
        %477 = vmatprep.subr.mxu0 0.0
        %v478 = vand.u32 %v273, 4294901760
        %v479 = vsub.f32 %v273, %v478
        %v480 = vand.u32 %v479, 4294901760
        %v481 = vsub.f32 %v479, %v480
        %v482 = vand.u32 %v481, 4294901760
        %483 = vmatpush1.msra.mxu0 %v482
        %484 = vmatprep.subr.mxu0 0.0
        %v485 = vand.u32 %v274, 4294901760
        %v486 = vsub.f32 %v274, %v485
        %v487 = vand.u32 %v486, 4294901760
        %v488 = vsub.f32 %v486, %v487
        %v489 = vand.u32 %v488, 4294901760
        %490 = vmatpush1.msra.mxu0 %v489
        %491 = vmatprep.subr.mxu0 0.0
        %v492 = vand.u32 %v275, 4294901760
        %v493 = vsub.f32 %v275, %v492
        %v494 = vand.u32 %v493, 4294901760
        %v495 = vsub.f32 %v493, %v494
        %v496 = vand.u32 %v495, 4294901760
        %497 = vmatpush1.msra.mxu0 %v496
        %498 = vmatprep.subr.mxu0 0.0
        %v499 = vand.u32 %v276, 4294901760
        %v500 = vsub.f32 %v276, %v499
        %v501 = vand.u32 %v500, 4294901760
        %v502 = vsub.f32 %v500, %v501
        %v503 = vand.u32 %v502, 4294901760
        %504 = vmatpush1.msra.mxu0 %v503
        %505 = vmatprep.subr.mxu0 0.0
        %v506 = vand.u32 %v277, 4294901760
        %v507 = vsub.f32 %v277, %v506
        %v508 = vand.u32 %v507, 4294901760
        %v509 = vsub.f32 %v507, %v508
        %v510 = vand.u32 %v509, 4294901760
        %511 = vmatpush1.msra.mxu0 %v510
        %512 = vmatprep.subr.mxu0 0.0
        %v513 = vand.u32 %v278, 4294901760
        %v514 = vsub.f32 %v278, %v513
        %v515 = vand.u32 %v514, 4294901760
        %v516 = vsub.f32 %v514, %v515
        %v517 = vand.u32 %v516, 4294901760
        %518 = vmatpush1.msra.mxu0 %v517
        %519 = vmatprep.subr.mxu0 0.0
        %v520 = vand.u32 %v279, 4294901760
        %v521 = vsub.f32 %v279, %v520
        %v522 = vand.u32 %v521, 4294901760
        %v523 = vsub.f32 %v521, %v522
        %v524 = vand.u32 %v523, 4294901760
        %525 = vmatpush1.msra.mxu0 %v524
        %526 = vmatprep.subr.mxu0 0.0
        %v527 = vand.u32 %v280, 4294901760
        %v528 = vsub.f32 %v280, %v527
        %v529 = vand.u32 %v528, 4294901760
        %v530 = vsub.f32 %v528, %v529
        %v531 = vand.u32 %v530, 4294901760
        %532 = vmatpush1.msra.mxu0 %v531
        %533 = vmatprep.subr.mxu0 0.0
        %v534 = vand.u32 %v281, 4294901760
        %v535 = vsub.f32 %v281, %v534
        %v536 = vand.u32 %v535, 4294901760
        %v537 = vsub.f32 %v535, %v536
        %v538 = vand.u32 %v537, 4294901760
        %539 = vmatpush1.msra.mxu0 %v538
        %540 = vmatprep.subr.mxu0 0.0
        %v541 = vand.u32 %v282, 4294901760
        %v542 = vsub.f32 %v282, %v541
        %v543 = vand.u32 %v542, 4294901760
        %v544 = vsub.f32 %v542, %v543
        %v545 = vand.u32 %v544, 4294901760
        %546 = vmatpush1.msra.mxu0 %v545
        %547 = vmatprep.subr.mxu0 0.0
        %v548 = vand.u32 %v283, 4294901760
        %v549 = vsub.f32 %v283, %v548
        %v550 = vand.u32 %v549, 4294901760
        %v551 = vsub.f32 %v549, %v550
        %v552 = vand.u32 %v551, 4294901760
        %553 = vmatpush1.msra.mxu0 %v552
        %554 = vmatprep.subr.mxu0 0.0
        %v555 = vand.u32 %v284, 4294901760
        %v556 = vsub.f32 %v284, %v555
        %v557 = vand.u32 %v556, 4294901760
        %v558 = vsub.f32 %v556, %v557
        %v559 = vand.u32 %v558, 4294901760
        %560 = vmatpush1.msra.mxu0 %v559
        %561 = vmatprep.subr.mxu0 0.0
        %v562 = vand.u32 %v285, 4294901760
        %v563 = vsub.f32 %v285, %v562
        %v564 = vand.u32 %v563, 4294901760
        %v565 = vsub.f32 %v563, %v564
        %v566 = vand.u32 %v565, 4294901760
        %567 = vmatpush1.msra.mxu0 %v566
        %568 = vmatprep.subr.mxu0 0.0
        %v569 = vand.u32 %v286, 4294901760
        %v570 = vsub.f32 %v286, %v569
        %v571 = vand.u32 %v570, 4294901760
        %v572 = vsub.f32 %v570, %v571
        %v573 = vand.u32 %v572, 4294901760
        %574 = vmatpush1.msra.mxu0 %v573
        %575 = vmatprep.subr.mxu0 0.0
        %v576 = vand.u32 %v287, 4294901760
        %v577 = vsub.f32 %v287, %v576
        %v578 = vand.u32 %v577, 4294901760
        %v579 = vsub.f32 %v577, %v578
        %v580 = vand.u32 %v579, 4294901760
        %581 = vmatpush1.msra.mxu0 %v580
        %582 = vmatprep.subr.mxu0 0.0
        %v583 = vand.u32 %v288, 4294901760
        %v584 = vsub.f32 %v288, %v583
        %v585 = vand.u32 %v584, 4294901760
        %v586 = vsub.f32 %v584, %v585
        %v587 = vand.u32 %v586, 4294901760
        %588 = vmatpush1.msra.mxu0 %v587
        %589 = vmatprep.subr.mxu0 0.0
        %v590 = vand.u32 %v289, 4294901760
        %v591 = vsub.f32 %v289, %v590
        %v592 = vand.u32 %v591, 4294901760
        %v593 = vsub.f32 %v591, %v592
        %v594 = vand.u32 %v593, 4294901760
        %595 = vmatpush1.msra.mxu0 %v594
        %596 = vmatprep.subr.mxu0 0.0
        %v597 = vand.u32 %v290, 4294901760
        %v598 = vsub.f32 %v290, %v597
        %v599 = vand.u32 %v598, 4294901760
        %v600 = vsub.f32 %v598, %v599
        %v601 = vand.u32 %v600, 4294901760
        %602 = vmatpush1.msra.mxu0 %v601
        %603 = vmatprep.subr.mxu0 0.0
        %v604 = vand.u32 %v291, 4294901760
        %v605 = vsub.f32 %v291, %v604
        %v606 = vand.u32 %v605, 4294901760
        %v607 = vsub.f32 %v605, %v606
        %v608 = vand.u32 %v607, 4294901760
        %609 = vmatpush1.msra.mxu0 %v608
        %610 = vmatprep.subr.mxu0 0.0
        %v611 = vand.u32 %v292, 4294901760
        %v612 = vsub.f32 %v292, %v611
        %v613 = vand.u32 %v612, 4294901760
        %v614 = vsub.f32 %v612, %v613
        %v615 = vand.u32 %v614, 4294901760
        %616 = vmatpush1.msra.mxu0 %v615
        %617 = vmatprep.subr.mxu0 0.0
        %v618 = vand.u32 %v293, 4294901760
        %v619 = vsub.f32 %v293, %v618
        %v620 = vand.u32 %v619, 4294901760
        %v621 = vsub.f32 %v619, %v620
        %v622 = vand.u32 %v621, 4294901760
        %623 = vmatpush1.msra.mxu0 %v622
        %624 = vmatprep.subr.mxu0 0.0
        %v625 = vand.u32 %v294, 4294901760
        %v626 = vsub.f32 %v294, %v625
        %v627 = vand.u32 %v626, 4294901760
        %v628 = vsub.f32 %v626, %v627
        %v629 = vand.u32 %v628, 4294901760
        %630 = vmatpush1.msra.mxu0 %v629
        %v631 = vand.u32 %v262, 4294901760
        %632 = vmatprep.mubr.f32.mxu0 %v631
        %v633 = vand.u32 %v261, 4294901760
        %634 = vmatmul.mubr.f32.gmra.mrb[0].mxu0 %v633
        %v635 = vpop.f32.mrb[0].mxu0
        %v636 = vadd.f32 %v404, %v635
        %v637 = vpop.f32.mrb[0].mxu0
        %638 = vdwg.mxu0
        %639 = vmatprep.subr.mxu0 0.0
        %v640 = vand.u32 %v263, 4294901760
        %v641 = vsub.f32 %v263, %v640
        %642 = vmatpush1.msra.mxu0 %v641
        %643 = vmatprep.subr.mxu0 0.0
        %v644 = vand.u32 %v264, 4294901760
        %v645 = vsub.f32 %v264, %v644
        %646 = vmatpush1.msra.mxu0 %v645
        %647 = vmatprep.subr.mxu0 0.0
        %v648 = vand.u32 %v265, 4294901760
        %v649 = vsub.f32 %v265, %v648
        %650 = vmatpush1.msra.mxu0 %v649
        %651 = vmatprep.subr.mxu0 0.0
        %v652 = vand.u32 %v266, 4294901760
        %v653 = vsub.f32 %v266, %v652
        %654 = vmatpush1.msra.mxu0 %v653
        %655 = vmatprep.subr.mxu0 0.0
        %v656 = vand.u32 %v267, 4294901760
        %v657 = vsub.f32 %v267, %v656
        %658 = vmatpush1.msra.mxu0 %v657
        %659 = vmatprep.subr.mxu0 0.0
        %v660 = vand.u32 %v268, 4294901760
        %v661 = vsub.f32 %v268, %v660
        %662 = vmatpush1.msra.mxu0 %v661
        %663 = vmatprep.subr.mxu0 0.0
        %v664 = vand.u32 %v269, 4294901760
        %v665 = vsub.f32 %v269, %v664
        %666 = vmatpush1.msra.mxu0 %v665
        %667 = vmatprep.subr.mxu0 0.0
        %v668 = vand.u32 %v270, 4294901760
        %v669 = vsub.f32 %v270, %v668
        %670 = vmatpush1.msra.mxu0 %v669
        %671 = vmatprep.subr.mxu0 0.0
        %v672 = vand.u32 %v271, 4294901760
        %v673 = vsub.f32 %v271, %v672
        %674 = vmatpush1.msra.mxu0 %v673
        %675 = vmatprep.subr.mxu0 0.0
        %v676 = vand.u32 %v272, 4294901760
        %v677 = vsub.f32 %v272, %v676
        %678 = vmatpush1.msra.mxu0 %v677
        %679 = vmatprep.subr.mxu0 0.0
        %v680 = vand.u32 %v273, 4294901760
        %v681 = vsub.f32 %v273, %v680
        %682 = vmatpush1.msra.mxu0 %v681
        %683 = vmatprep.subr.mxu0 0.0
        %v684 = vand.u32 %v274, 4294901760
        %v685 = vsub.f32 %v274, %v684
        %686 = vmatpush1.msra.mxu0 %v685
        %687 = vmatprep.subr.mxu0 0.0
        %v688 = vand.u32 %v275, 4294901760
        %v689 = vsub.f32 %v275, %v688
        %690 = vmatpush1.msra.mxu0 %v689
        %691 = vmatprep.subr.mxu0 0.0
        %v692 = vand.u32 %v276, 4294901760
        %v693 = vsub.f32 %v276, %v692
        %694 = vmatpush1.msra.mxu0 %v693
        %695 = vmatprep.subr.mxu0 0.0
        %v696 = vand.u32 %v277, 4294901760
        %v697 = vsub.f32 %v277, %v696
        %698 = vmatpush1.msra.mxu0 %v697
        %699 = vmatprep.subr.mxu0 0.0
        %v700 = vand.u32 %v278, 4294901760
        %v701 = vsub.f32 %v278, %v700
        %702 = vmatpush1.msra.mxu0 %v701
        %703 = vmatprep.subr.mxu0 0.0
        %v704 = vand.u32 %v279, 4294901760
        %v705 = vsub.f32 %v279, %v704
        %706 = vmatpush1.msra.mxu0 %v705
        %707 = vmatprep.subr.mxu0 0.0
        %v708 = vand.u32 %v280, 4294901760
        %v709 = vsub.f32 %v280, %v708
        %710 = vmatpush1.msra.mxu0 %v709
        %711 = vmatprep.subr.mxu0 0.0
        %v712 = vand.u32 %v281, 4294901760
        %v713 = vsub.f32 %v281, %v712
        %714 = vmatpush1.msra.mxu0 %v713
        %715 = vmatprep.subr.mxu0 0.0
        %v716 = vand.u32 %v282, 4294901760
        %v717 = vsub.f32 %v282, %v716
        %718 = vmatpush1.msra.mxu0 %v717
        %719 = vmatprep.subr.mxu0 0.0
        %v720 = vand.u32 %v283, 4294901760
        %v721 = vsub.f32 %v283, %v720
        %722 = vmatpush1.msra.mxu0 %v721
        %723 = vmatprep.subr.mxu0 0.0
        %v724 = vand.u32 %v284, 4294901760
        %v725 = vsub.f32 %v284, %v724
        %726 = vmatpush1.msra.mxu0 %v725
        %727 = vmatprep.subr.mxu0 0.0
        %v728 = vand.u32 %v285, 4294901760
        %v729 = vsub.f32 %v285, %v728
        %730 = vmatpush1.msra.mxu0 %v729
        %731 = vmatprep.subr.mxu0 0.0
        %v732 = vand.u32 %v286, 4294901760
        %v733 = vsub.f32 %v286, %v732
        %734 = vmatpush1.msra.mxu0 %v733
        %735 = vmatprep.subr.mxu0 0.0
        %v736 = vand.u32 %v287, 4294901760
        %v737 = vsub.f32 %v287, %v736
        %738 = vmatpush1.msra.mxu0 %v737
        %739 = vmatprep.subr.mxu0 0.0
        %v740 = vand.u32 %v288, 4294901760
        %v741 = vsub.f32 %v288, %v740
        %742 = vmatpush1.msra.mxu0 %v741
        %743 = vmatprep.subr.mxu0 0.0
        %v744 = vand.u32 %v289, 4294901760
        %v745 = vsub.f32 %v289, %v744
        %746 = vmatpush1.msra.mxu0 %v745
        %747 = vmatprep.subr.mxu0 0.0
        %v748 = vand.u32 %v290, 4294901760
        %v749 = vsub.f32 %v290, %v748
        %750 = vmatpush1.msra.mxu0 %v749
        %751 = vmatprep.subr.mxu0 0.0
        %v752 = vand.u32 %v291, 4294901760
        %v753 = vsub.f32 %v291, %v752
        %754 = vmatpush1.msra.mxu0 %v753
        %755 = vmatprep.subr.mxu0 0.0
        %v756 = vand.u32 %v292, 4294901760
        %v757 = vsub.f32 %v292, %v756
        %758 = vmatpush1.msra.mxu0 %v757
        %759 = vmatprep.subr.mxu0 0.0
        %v760 = vand.u32 %v293, 4294901760
        %v761 = vsub.f32 %v293, %v760
        %762 = vmatpush1.msra.mxu0 %v761
        %763 = vmatprep.subr.mxu0 0.0
        %v764 = vand.u32 %v294, 4294901760
        %v765 = vsub.f32 %v294, %v764
        %766 = vmatpush1.msra.mxu0 %v765
        %v767 = vand.u32 %v262, 4294901760
        %v768 = vsub.f32 %v262, %v767
        %769 = vmatprep.mubr.f32.mxu0 %v768
        %v770 = vand.u32 %v261, 4294901760
        %v771 = vsub.f32 %v261, %v770
        %772 = vmatmul.mubr.f32.gmra.mrb[0].mxu0 %v771
        %v773 = vpop.f32.mrb[0].mxu0
        %v774 = vadd.f32 %v636, %v773
        %v775 = vpop.f32.mrb[0].mxu0
        %776 = vdwg.mxu0
        %777 = vmatprep.subr.mxu0 0.0
        %v778 = vand.u32 %v263, 4294901760
        %779 = vmatpush1.msra.mxu0 %v778
        %780 = vmatprep.subr.mxu0 0.0
        %v781 = vand.u32 %v264, 4294901760
        %782 = vmatpush1.msra.mxu0 %v781
        %783 = vmatprep.subr.mxu0 0.0
        %v784 = vand.u32 %v265, 4294901760
        %785 = vmatpush1.msra.mxu0 %v784
        %786 = vmatprep.subr.mxu0 0.0
        %v787 = vand.u32 %v266, 4294901760
        %788 = vmatpush1.msra.mxu0 %v787
        %789 = vmatprep.subr.mxu0 0.0
        %v790 = vand.u32 %v267, 4294901760
        %791 = vmatpush1.msra.mxu0 %v790
        %792 = vmatprep.subr.mxu0 0.0
        %v793 = vand.u32 %v268, 4294901760
        %794 = vmatpush1.msra.mxu0 %v793
        %795 = vmatprep.subr.mxu0 0.0
        %v796 = vand.u32 %v269, 4294901760
        %797 = vmatpush1.msra.mxu0 %v796
        %798 = vmatprep.subr.mxu0 0.0
        %v799 = vand.u32 %v270, 4294901760
        %800 = vmatpush1.msra.mxu0 %v799
        %801 = vmatprep.subr.mxu0 0.0
        %v802 = vand.u32 %v271, 4294901760
        %803 = vmatpush1.msra.mxu0 %v802
        %804 = vmatprep.subr.mxu0 0.0
        %v805 = vand.u32 %v272, 4294901760
        %806 = vmatpush1.msra.mxu0 %v805
        %807 = vmatprep.subr.mxu0 0.0
        %v808 = vand.u32 %v273, 4294901760
        %809 = vmatpush1.msra.mxu0 %v808
        %810 = vmatprep.subr.mxu0 0.0
        %v811 = vand.u32 %v274, 4294901760
        %812 = vmatpush1.msra.mxu0 %v811
        %813 = vmatprep.subr.mxu0 0.0
        %v814 = vand.u32 %v275, 4294901760
        %815 = vmatpush1.msra.mxu0 %v814
        %816 = vmatprep.subr.mxu0 0.0
        %v817 = vand.u32 %v276, 4294901760
        %818 = vmatpush1.msra.mxu0 %v817
        %819 = vmatprep.subr.mxu0 0.0
        %v820 = vand.u32 %v277, 4294901760
        %821 = vmatpush1.msra.mxu0 %v820
        %822 = vmatprep.subr.mxu0 0.0
        %v823 = vand.u32 %v278, 4294901760
        %824 = vmatpush1.msra.mxu0 %v823
        %825 = vmatprep.subr.mxu0 0.0
        %v826 = vand.u32 %v279, 4294901760
        %827 = vmatpush1.msra.mxu0 %v826
        %828 = vmatprep.subr.mxu0 0.0
        %v829 = vand.u32 %v280, 4294901760
        %830 = vmatpush1.msra.mxu0 %v829
        %831 = vmatprep.subr.mxu0 0.0
        %v832 = vand.u32 %v281, 4294901760
        %833 = vmatpush1.msra.mxu0 %v832
        %834 = vmatprep.subr.mxu0 0.0
        %v835 = vand.u32 %v282, 4294901760
        %836 = vmatpush1.msra.mxu0 %v835
        %837 = vmatprep.subr.mxu0 0.0
        %v838 = vand.u32 %v283, 4294901760
        %839 = vmatpush1.msra.mxu0 %v838
        %840 = vmatprep.subr.mxu0 0.0
        %v841 = vand.u32 %v284, 4294901760
        %842 = vmatpush1.msra.mxu0 %v841
        %843 = vmatprep.subr.mxu0 0.0
        %v844 = vand.u32 %v285, 4294901760
        %845 = vmatpush1.msra.mxu0 %v844
        %846 = vmatprep.subr.mxu0 0.0
        %v847 = vand.u32 %v286, 4294901760
        %848 = vmatpush1.msra.mxu0 %v847
        %849 = vmatprep.subr.mxu0 0.0
        %v850 = vand.u32 %v287, 4294901760
        %851 = vmatpush1.msra.mxu0 %v850
        %852 = vmatprep.subr.mxu0 0.0
        %v853 = vand.u32 %v288, 4294901760
        %854 = vmatpush1.msra.mxu0 %v853
        %855 = vmatprep.subr.mxu0 0.0
        %v856 = vand.u32 %v289, 4294901760
        %857 = vmatpush1.msra.mxu0 %v856
        %858 = vmatprep.subr.mxu0 0.0
        %v859 = vand.u32 %v290, 4294901760
        %860 = vmatpush1.msra.mxu0 %v859
        %861 = vmatprep.subr.mxu0 0.0
        %v862 = vand.u32 %v291, 4294901760
        %863 = vmatpush1.msra.mxu0 %v862
        %864 = vmatprep.subr.mxu0 0.0
        %v865 = vand.u32 %v292, 4294901760
        %866 = vmatpush1.msra.mxu0 %v865
        %867 = vmatprep.subr.mxu0 0.0
        %v868 = vand.u32 %v293, 4294901760
        %869 = vmatpush1.msra.mxu0 %v868
        %870 = vmatprep.subr.mxu0 0.0
        %v871 = vand.u32 %v294, 4294901760
        %872 = vmatpush1.msra.mxu0 %v871
        %v873 = vand.u32 %v262, 4294901760
        %v874 = vsub.f32 %v262, %v873
        %v875 = vand.u32 %v874, 4294901760
        %876 = vmatprep.mubr.f32.mxu0 %v875
        %v877 = vand.u32 %v261, 4294901760
        %v878 = vsub.f32 %v261, %v877
        %v879 = vand.u32 %v878, 4294901760
        %880 = vmatmul.mubr.f32.gmra.mrb[0].mxu0 %v879
        %v881 = vpop.f32.mrb[0].mxu0
        %v882 = vadd.f32 %v774, %v881
        %v883 = vpop.f32.mrb[0].mxu0
        %884 = vdwg.mxu0
        %885 = vmatprep.subr.mxu0 0.0
        %v886 = vand.u32 %v263, 4294901760
        %v887 = vsub.f32 %v263, %v886
        %v888 = vand.u32 %v887, 4294901760
        %889 = vmatpush1.msra.mxu0 %v888
        %890 = vmatprep.subr.mxu0 0.0
        %v891 = vand.u32 %v264, 4294901760
        %v892 = vsub.f32 %v264, %v891
        %v893 = vand.u32 %v892, 4294901760
        %894 = vmatpush1.msra.mxu0 %v893
        %895 = vmatprep.subr.mxu0 0.0
        %v896 = vand.u32 %v265, 4294901760
        %v897 = vsub.f32 %v265, %v896
        %v898 = vand.u32 %v897, 4294901760
        %899 = vmatpush1.msra.mxu0 %v898
        %900 = vmatprep.subr.mxu0 0.0
        %v901 = vand.u32 %v266, 4294901760
        %v902 = vsub.f32 %v266, %v901
        %v903 = vand.u32 %v902, 4294901760
        %904 = vmatpush1.msra.mxu0 %v903
        %905 = vmatprep.subr.mxu0 0.0
        %v906 = vand.u32 %v267, 4294901760
        %v907 = vsub.f32 %v267, %v906
        %v908 = vand.u32 %v907, 4294901760
        %909 = vmatpush1.msra.mxu0 %v908
        %910 = vmatprep.subr.mxu0 0.0
        %v911 = vand.u32 %v268, 4294901760
        %v912 = vsub.f32 %v268, %v911
        %v913 = vand.u32 %v912, 4294901760
        %914 = vmatpush1.msra.mxu0 %v913
        %915 = vmatprep.subr.mxu0 0.0
        %v916 = vand.u32 %v269, 4294901760
        %v917 = vsub.f32 %v269, %v916
        %v918 = vand.u32 %v917, 4294901760
        %919 = vmatpush1.msra.mxu0 %v918
        %920 = vmatprep.subr.mxu0 0.0
        %v921 = vand.u32 %v270, 4294901760
        %v922 = vsub.f32 %v270, %v921
        %v923 = vand.u32 %v922, 4294901760
        %924 = vmatpush1.msra.mxu0 %v923
        %925 = vmatprep.subr.mxu0 0.0
        %v926 = vand.u32 %v271, 4294901760
        %v927 = vsub.f32 %v271, %v926
        %v928 = vand.u32 %v927, 4294901760
        %929 = vmatpush1.msra.mxu0 %v928
        %930 = vmatprep.subr.mxu0 0.0
        %v931 = vand.u32 %v272, 4294901760
        %v932 = vsub.f32 %v272, %v931
        %v933 = vand.u32 %v932, 4294901760
        %934 = vmatpush1.msra.mxu0 %v933
        %935 = vmatprep.subr.mxu0 0.0
        %v936 = vand.u32 %v273, 4294901760
        %v937 = vsub.f32 %v273, %v936
        %v938 = vand.u32 %v937, 4294901760
        %939 = vmatpush1.msra.mxu0 %v938
        %940 = vmatprep.subr.mxu0 0.0
        %v941 = vand.u32 %v274, 4294901760
        %v942 = vsub.f32 %v274, %v941
        %v943 = vand.u32 %v942, 4294901760
        %944 = vmatpush1.msra.mxu0 %v943
        %945 = vmatprep.subr.mxu0 0.0
        %v946 = vand.u32 %v275, 4294901760
        %v947 = vsub.f32 %v275, %v946
        %v948 = vand.u32 %v947, 4294901760
        %949 = vmatpush1.msra.mxu0 %v948
        %950 = vmatprep.subr.mxu0 0.0
        %v951 = vand.u32 %v276, 4294901760
        %v952 = vsub.f32 %v276, %v951
        %v953 = vand.u32 %v952, 4294901760
        %954 = vmatpush1.msra.mxu0 %v953
        %955 = vmatprep.subr.mxu0 0.0
        %v956 = vand.u32 %v277, 4294901760
        %v957 = vsub.f32 %v277, %v956
        %v958 = vand.u32 %v957, 4294901760
        %959 = vmatpush1.msra.mxu0 %v958
        %960 = vmatprep.subr.mxu0 0.0
        %v961 = vand.u32 %v278, 4294901760
        %v962 = vsub.f32 %v278, %v961
        %v963 = vand.u32 %v962, 4294901760
        %964 = vmatpush1.msra.mxu0 %v963
        %965 = vmatprep.subr.mxu0 0.0
        %v966 = vand.u32 %v279, 4294901760
        %v967 = vsub.f32 %v279, %v966
        %v968 = vand.u32 %v967, 4294901760
        %969 = vmatpush1.msra.mxu0 %v968
        %970 = vmatprep.subr.mxu0 0.0
        %v971 = vand.u32 %v280, 4294901760
        %v972 = vsub.f32 %v280, %v971
        %v973 = vand.u32 %v972, 4294901760
        %974 = vmatpush1.msra.mxu0 %v973
        %975 = vmatprep.subr.mxu0 0.0
        %v976 = vand.u32 %v281, 4294901760
        %v977 = vsub.f32 %v281, %v976
        %v978 = vand.u32 %v977, 4294901760
        %979 = vmatpush1.msra.mxu0 %v978
        %980 = vmatprep.subr.mxu0 0.0
        %v981 = vand.u32 %v282, 4294901760
        %v982 = vsub.f32 %v282, %v981
        %v983 = vand.u32 %v982, 4294901760
        %984 = vmatpush1.msra.mxu0 %v983
        %985 = vmatprep.subr.mxu0 0.0
        %v986 = vand.u32 %v283, 4294901760
        %v987 = vsub.f32 %v283, %v986
        %v988 = vand.u32 %v987, 4294901760
        %989 = vmatpush1.msra.mxu0 %v988
        %990 = vmatprep.subr.mxu0 0.0
        %v991 = vand.u32 %v284, 4294901760
        %v992 = vsub.f32 %v284, %v991
        %v993 = vand.u32 %v992, 4294901760
        %994 = vmatpush1.msra.mxu0 %v993
        %995 = vmatprep.subr.mxu0 0.0
        %v996 = vand.u32 %v285, 4294901760
        %v997 = vsub.f32 %v285, %v996
        %v998 = vand.u32 %v997, 4294901760
        %999 = vmatpush1.msra.mxu0 %v998
        %1000 = vmatprep.subr.mxu0 0.0
        %v1001 = vand.u32 %v286, 4294901760
        %v1002 = vsub.f32 %v286, %v1001
        %v1003 = vand.u32 %v1002, 4294901760
        %1004 = vmatpush1.msra.mxu0 %v1003
        %1005 = vmatprep.subr.mxu0 0.0
        %v1006 = vand.u32 %v287, 4294901760
        %v1007 = vsub.f32 %v287, %v1006
        %v1008 = vand.u32 %v1007, 4294901760
        %1009 = vmatpush1.msra.mxu0 %v1008
        %1010 = vmatprep.subr.mxu0 0.0
        %v1011 = vand.u32 %v288, 4294901760
        %v1012 = vsub.f32 %v288, %v1011
        %v1013 = vand.u32 %v1012, 4294901760
        %1014 = vmatpush1.msra.mxu0 %v1013
        %1015 = vmatprep.subr.mxu0 0.0
        %v1016 = vand.u32 %v289, 4294901760
        %v1017 = vsub.f32 %v289, %v1016
        %v1018 = vand.u32 %v1017, 4294901760
        %1019 = vmatpush1.msra.mxu0 %v1018
        %1020 = vmatprep.subr.mxu0 0.0
        %v1021 = vand.u32 %v290, 4294901760
        %v1022 = vsub.f32 %v290, %v1021
        %v1023 = vand.u32 %v1022, 4294901760
        %1024 = vmatpush1.msra.mxu0 %v1023
        %1025 = vmatprep.subr.mxu0 0.0
        %v1026 = vand.u32 %v291, 4294901760
        %v1027 = vsub.f32 %v291, %v1026
        %v1028 = vand.u32 %v1027, 4294901760
        %1029 = vmatpush1.msra.mxu0 %v1028
        %1030 = vmatprep.subr.mxu0 0.0
        %v1031 = vand.u32 %v292, 4294901760
        %v1032 = vsub.f32 %v292, %v1031
        %v1033 = vand.u32 %v1032, 4294901760
        %1034 = vmatpush1.msra.mxu0 %v1033
        %1035 = vmatprep.subr.mxu0 0.0
        %v1036 = vand.u32 %v293, 4294901760
        %v1037 = vsub.f32 %v293, %v1036
        %v1038 = vand.u32 %v1037, 4294901760
        %1039 = vmatpush1.msra.mxu0 %v1038
        %1040 = vmatprep.subr.mxu0 0.0
        %v1041 = vand.u32 %v294, 4294901760
        %v1042 = vsub.f32 %v294, %v1041
        %v1043 = vand.u32 %v1042, 4294901760
        %1044 = vmatpush1.msra.mxu0 %v1043
        %v1045 = vand.u32 %v262, 4294901760
        %1046 = vmatprep.mubr.f32.mxu0 %v1045
        %v1047 = vand.u32 %v261, 4294901760
        %1048 = vmatmul.mubr.f32.gmra.mrb[0].mxu0 %v1047
        %v1049 = vpop.f32.mrb[0].mxu0
        %v1050 = vadd.f32 %v882, %v1049
        %v1051 = vpop.f32.mrb[0].mxu0
        %1052 = vdwg.mxu0
        %1053 = vmatprep.subr.mxu0 0.0
        %v1054 = vand.u32 %v263, 4294901760
        %1055 = vmatpush1.msra.mxu0 %v1054
        %1056 = vmatprep.subr.mxu0 0.0
        %v1057 = vand.u32 %v264, 4294901760
        %1058 = vmatpush1.msra.mxu0 %v1057
        %1059 = vmatprep.subr.mxu0 0.0
        %v1060 = vand.u32 %v265, 4294901760
        %1061 = vmatpush1.msra.mxu0 %v1060
        %1062 = vmatprep.subr.mxu0 0.0
        %v1063 = vand.u32 %v266, 4294901760
        %1064 = vmatpush1.msra.mxu0 %v1063
        %1065 = vmatprep.subr.mxu0 0.0
        %v1066 = vand.u32 %v267, 4294901760
        %1067 = vmatpush1.msra.mxu0 %v1066
        %1068 = vmatprep.subr.mxu0 0.0
        %v1069 = vand.u32 %v268, 4294901760
        %1070 = vmatpush1.msra.mxu0 %v1069
        %1071 = vmatprep.subr.mxu0 0.0
        %v1072 = vand.u32 %v269, 4294901760
        %1073 = vmatpush1.msra.mxu0 %v1072
        %1074 = vmatprep.subr.mxu0 0.0
        %v1075 = vand.u32 %v270, 4294901760
        %1076 = vmatpush1.msra.mxu0 %v1075
        %1077 = vmatprep.subr.mxu0 0.0
        %v1078 = vand.u32 %v271, 4294901760
        %1079 = vmatpush1.msra.mxu0 %v1078
        %1080 = vmatprep.subr.mxu0 0.0
        %v1081 = vand.u32 %v272, 4294901760
        %1082 = vmatpush1.msra.mxu0 %v1081
        %1083 = vmatprep.subr.mxu0 0.0
        %v1084 = vand.u32 %v273, 4294901760
        %1085 = vmatpush1.msra.mxu0 %v1084
        %1086 = vmatprep.subr.mxu0 0.0
        %v1087 = vand.u32 %v274, 4294901760
        %1088 = vmatpush1.msra.mxu0 %v1087
        %1089 = vmatprep.subr.mxu0 0.0
        %v1090 = vand.u32 %v275, 4294901760
        %1091 = vmatpush1.msra.mxu0 %v1090
        %1092 = vmatprep.subr.mxu0 0.0
        %v1093 = vand.u32 %v276, 4294901760
        %1094 = vmatpush1.msra.mxu0 %v1093
        %1095 = vmatprep.subr.mxu0 0.0
        %v1096 = vand.u32 %v277, 4294901760
        %1097 = vmatpush1.msra.mxu0 %v1096
        %1098 = vmatprep.subr.mxu0 0.0
        %v1099 = vand.u32 %v278, 4294901760
        %1100 = vmatpush1.msra.mxu0 %v1099
        %1101 = vmatprep.subr.mxu0 0.0
        %v1102 = vand.u32 %v279, 4294901760
        %1103 = vmatpush1.msra.mxu0 %v1102
        %1104 = vmatprep.subr.mxu0 0.0
        %v1105 = vand.u32 %v280, 4294901760
        %1106 = vmatpush1.msra.mxu0 %v1105
        %1107 = vmatprep.subr.mxu0 0.0
        %v1108 = vand.u32 %v281, 4294901760
        %1109 = vmatpush1.msra.mxu0 %v1108
        %1110 = vmatprep.subr.mxu0 0.0
        %v1111 = vand.u32 %v282, 4294901760
        %1112 = vmatpush1.msra.mxu0 %v1111
        %1113 = vmatprep.subr.mxu0 0.0
        %v1114 = vand.u32 %v283, 4294901760
        %1115 = vmatpush1.msra.mxu0 %v1114
        %1116 = vmatprep.subr.mxu0 0.0
        %v1117 = vand.u32 %v284, 4294901760
        %1118 = vmatpush1.msra.mxu0 %v1117
        %1119 = vmatprep.subr.mxu0 0.0
        %v1120 = vand.u32 %v285, 4294901760
        %1121 = vmatpush1.msra.mxu0 %v1120
        %1122 = vmatprep.subr.mxu0 0.0
        %v1123 = vand.u32 %v286, 4294901760
        %1124 = vmatpush1.msra.mxu0 %v1123
        %1125 = vmatprep.subr.mxu0 0.0
        %v1126 = vand.u32 %v287, 4294901760
        %1127 = vmatpush1.msra.mxu0 %v1126
        %1128 = vmatprep.subr.mxu0 0.0
        %v1129 = vand.u32 %v288, 4294901760
        %1130 = vmatpush1.msra.mxu0 %v1129
        %1131 = vmatprep.subr.mxu0 0.0
        %v1132 = vand.u32 %v289, 4294901760
        %1133 = vmatpush1.msra.mxu0 %v1132
        %1134 = vmatprep.subr.mxu0 0.0
        %v1135 = vand.u32 %v290, 4294901760
        %1136 = vmatpush1.msra.mxu0 %v1135
        %1137 = vmatprep.subr.mxu0 0.0
        %v1138 = vand.u32 %v291, 4294901760
        %1139 = vmatpush1.msra.mxu0 %v1138
        %1140 = vmatprep.subr.mxu0 0.0
        %v1141 = vand.u32 %v292, 4294901760
        %1142 = vmatpush1.msra.mxu0 %v1141
        %1143 = vmatprep.subr.mxu0 0.0
        %v1144 = vand.u32 %v293, 4294901760
        %1145 = vmatpush1.msra.mxu0 %v1144
        %1146 = vmatprep.subr.mxu0 0.0
        %v1147 = vand.u32 %v294, 4294901760
        %1148 = vmatpush1.msra.mxu0 %v1147
        %v1149 = vand.u32 %v262, 4294901760
        %1150 = vmatprep.mubr.f32.mxu0 %v1149
        %v1151 = vand.u32 %v261, 4294901760
        %1152 = vmatmul.mubr.f32.gmra.mrb[0].mxu0 %v1151
        %v1153 = vpop.f32.mrb[0].mxu0
        %v1154 = vadd.f32 %v1050, %v1153
        %v1155 = vpop.f32.mrb[0].mxu0
        %1156 = vdwg.mxu0
        %vm1157 = vcmask 122880
        %v1158 = vsel %vm1157, %v1154, 0.0
        %1159 = vadd.xlane.f32.xlu0 %v1158
        %v1160 = vpop.xlane.xlu0 %1159
        %v1161 = vrot.slane %v1160, 4
        %v1162 = vadd.f32 %v1160, %v1161
        %v1163 = vrot.slane %v1162, 2
        %v1164 = vadd.f32 %v1162, %v1163
        %v1165 = vrot.slane %v1164, 1
        %v1166 = vadd.f32 %v1164, %v1165
        %s1167 = vtos %v1166
        %v1169 = vrot.slane %v1154, 1
        %v1171 = vsel %vm1157, %v1169, 0.0
        %1172 = vadd.xlane.f32.xlu0 %v1171
        %v1173 = vpop.xlane.xlu0 %1172
        %v1174 = vrot.slane %v1173, 4
        %v1175 = vadd.f32 %v1173, %v1174
        %v1176 = vrot.slane %v1175, 2
        %v1177 = vadd.f32 %v1175, %v1176
        %v1178 = vrot.slane %v1177, 1
        %v1179 = vadd.f32 %v1177, %v1178
        %s1180 = vtos %v1179
        %v1181 = vmax.f32 %v1154, 1e-16
        %v1182 = vrsqrt.pop %v1181
        %v1184 = vrot.slane %v1182, 2
        %v1186 = vmul.f32 %v1154, %v1184
        %v1187 = vrot.slane %v1182, 4
        %v1189 = vmul.f32 %v1186, %v1187
        %v1190 = vsub.f32 1.0, %v1189
        %v1192 = vrot.slane %v1190, 2
        %vm1194 = vcmask 123904
        %v1195 = vsel %vm1194, %v1192, 0.0
        %1196 = vadd.xlane.f32.xlu0 %v1195
        %v1197 = vpop.xlane.xlu0 %1196
        %v1198 = vrot.slane %v1197, 4
        %v1199 = vadd.f32 %v1197, %v1198
        %v1200 = vrot.slane %v1199, 2
        %v1201 = vadd.f32 %v1199, %v1200
        %v1202 = vrot.slane %v1201, 1
        %v1203 = vadd.f32 %v1201, %v1202
        %s1204 = vtos %v1203
        %v1205 = vlaneseq
        %v1206 = vand.u32 %v1205, 127
        %vm1207 = vcmp.eq.s32.totalorder %v1206, 0
        %vm1208 = vcmp.eq.s32.totalorder %v1206, 1
        %v1209 = vstv %s1180
        %v1210 = vstv %s1204
        %v1211 = vsel %vm1208, %v1209, %v1210
        %v1212 = vstv %s1167
        %v1213 = vsel %vm1207, %v1212, %v1211
        %p1214 = scmp.eq.s32.totalorder %s22, 0
        // Predicated region
        $region33: #{tpu_custom_call.1} parent=31 // pred_check
          %p1215 = pneg %p1214
        $region34: #{tpu_custom_call.1} parent=31 // pred_check_branch
          %1217 = sbr.rel (%p1215) target = $region36
        $region35: #{tpu_custom_call.1} parent=31 // pred_region
          %vm1218 = vcmask 16384
          %1219 = vst.msk [vmem:[%s211] sm:$0x1] %vm1218, 0.0
        $region36: #{tpu_custom_call.1} parent=31 // pred_fallthru
          _
        %v1220 = vld [vmem:[%s211] sm:$0x1]
        %v1221 = vadd.f32 %v1220, %v1213
        %vm1222 = vcmask 16384
        %1223 = vst.msk [vmem:[%s211] sm:$0x1] %vm1222, %v1221
        %s1224 = sand.u32 %s114, 1
        %s1225 = scalar_lea.sflag [#allocation3], %s1224
        %s1226 = sand.u32 %s114, 1
        %s1227 = scalar_lea.vmem [#allocation2], %s1226
        // Predicated region
        $region37: #{tpu_custom_call.1} parent=31 // pred_check
          %p1228 = pneg %p124
        $region38: #{tpu_custom_call.1} parent=31 // pred_check_branch
          %1230 = sbr.rel (%p1228) target = $region40
        $region39: #{tpu_custom_call.1} parent=31 // pred_region
          %s1232 = ssub.s32 16, 16
          %1233 = vsyncadd %s1225, %s1232
          %s1234 = smul.addr %s21, 16
          %s1235 = scalar_lea.hbm %s3, %s1234
          %s1237 = sshll.u32 %s1227, 4
          %s1238 = int_to_ptr.vmem [resolvable:$true] %s1237
          %1240 = dma.vmem_to_hbm [thread:$0]  %s1238, 16, %s1235, %s1225
        $region40: #{tpu_custom_call.1} parent=31 // pred_fallthru
          _
      $region32: #{tpu_custom_call.1} parent=5 // pred_fallthru
        _
      %p1241 = scmp.le.s32.totalorder 2, %s12
      // Predicated region
      $region41: #{tpu_custom_call.1} parent=5 // pred_check
        %p1242 = pneg %p1241
      $region42: #{tpu_custom_call.1} parent=5 // pred_check_branch
        %1244 = sbr.rel (%p1242) target = $region44
      $region43: #{tpu_custom_call.1} parent=5 // pred_region
        %s1245 = ssub.s32 %s12, 2
        // Predicated region
        $region45: #{tpu_custom_call.1} parent=43 // pred_check
          %p1246 = pneg %p130
        $region46: #{tpu_custom_call.1} parent=43 // pred_check_branch
          %1248 = sbr.rel (%p1246) target = $region48
        $region47: #{tpu_custom_call.1} parent=43 // pred_region
          %s1249 = sand.u32 %s115, 1
          %s1250 = scalar_lea.sflag [#allocation3], %s1249
          %s1251 = sand.u32 %s115, 1
          %s1252 = scalar_lea.vmem [#allocation2], %s1251
          %1253 = dma.done %s1250, 16
        $region48: #{tpu_custom_call.1} parent=43 // pred_fallthru
          _
      $region44: #{tpu_custom_call.1} parent=5 // pred_fallthru
        _
    $region6: #{tpu_custom_call.1} parent=1 // loop_footer
      %s16 = sadd.s32 1, %s12
    $region7: #{tpu_custom_call.1} parent=1 // loop_footer_branch
      %11 = sbr.rel target = $region3
    $region8: #{tpu_custom_call.1} parent=1 // loop_exit
      _
    %1254 = vsyncpa [#allocation3], 1
    %s1255 = scalar_lea.sflag [#allocation3], 1
    %1256 = vsyncpa %s1255, 1

</llo_original>
